<compile_context>
chip_gen: v7x
topology: tpu7x:2x2x1
jax: 0.10.0
libtpu: 0.0.40
codegen_flags: <defaults>
</compile_context>

<pallas_src>
import jax
import jax.numpy as jnp
from jax import lax
from jax.experimental import pallas as pl
from jax.experimental.pallas import tpu as pltpu


def encoder_kernel(x_ref, amped2_ref, w1_ref, b1_ref, w2_ref, b2_ref, bias_ref,
                   zt_ref, klp_ref):
    Bb, N, V = x_ref.shape
    L = zt_ref.shape[0]

    # ---- Batch-fused MLP on the feature (last) dim --------------------------
    x2d = x_ref[...].reshape(Bb * N, V)                                  # (Bb*N, V)
    h = jnp.dot(x2d, w1_ref[...], preferred_element_type=jnp.float32) + b1_ref[...]
    h = jnp.maximum(h, 0.0)                                              # ReLU
    y = jnp.dot(h, w2_ref[...], preferred_element_type=jnp.float32) + b2_ref[...]

    # ---- SEM mix: z[b] = amped2 @ (y[b] + bias) - bias  (batched over Bb) ---
    yb3 = (y + bias_ref[...]).reshape(Bb, N, L)                          # (Bb, N, L)
    a_b = jnp.broadcast_to(amped2_ref[...], (Bb, N, N))                  # shared A
    z3 = lax.dot_general(                                                # (Bb, N, L)
        a_b, yb3,
        dimension_numbers=(((2,), (1,)), ((0,), (0,))),
        preferred_element_type=jnp.float32)

    # ---- Lane-dense store: write z transposed as (L, Bb*N) ------------------
    zT = z3.reshape(Bb * N, L).T - bias_ref[...].T                       # (L, Bb*N)
    zt_ref[...] = zT

    # ---- KL partial for this grid step (scaled by 0.5/B in the wrapper) -----
    klp_ref[...] = jnp.sum(zT * zT, keepdims=True)                       # (1, 1)


def _pick_block_b(B, N, target_rows=256):
    """Batch elements fused per grid step: try to fill the MXU M dimension
    (>= target_rows fused rows) while keeping >= 2 grid steps when possible
    (v7x has 2 TensorCores and the grid axis is marked 'parallel')."""
    divisors = [d for d in range(1, B + 1) if B % d == 0]
    multi_step = [d for d in divisors if B // d >= 2]
    for d in multi_step:
        if d * N >= target_rows:
            return d
    if multi_step:
        return multi_step[-1]
    return B


def encoder_forward(x, params, block_b=None):
    """x: (B, N, V) float32.  Returns (z_mu (B, N, L), kl scalar)."""
    B, N, V = x.shape
    H = params["w1"].shape[1]
    L = params["w2"].shape[1]

    Bb = block_b if block_b is not None else _pick_block_b(B, N)
    assert B % Bb == 0, "batch must be divisible by the batch block"
    G = B // Bb

    # Batch-invariant SEM matrix, hoisted out of the kernel (computed once).
    amped2 = jnp.eye(N, dtype=jnp.float32) - jnp.sinh(3.0 * params["adj_A"]).T

    cost = pl.CostEstimate(
        flops=2 * B * N * (V * H + H * L + N * L),
        transcendentals=0,
        bytes_accessed=4 * (B * N * V + N * N + V * H + H + H * L + 2 * L
                            + B * N * L + G),
    )

    # TODO(synk): if num_vars grows so adj_A / the (Bb*N, H) tiles no longer fit
    # v7x's 64 MiB VMEM, add a row-tiling grid axis and set vmem_limit_bytes.
    zt, kl_part = pl.pallas_call(
        encoder_kernel,
        out_shape=(
            jax.ShapeDtypeStruct((G, L, Bb * N), jnp.float32),  # z, transposed
            jax.ShapeDtypeStruct((G, 1, 1), jnp.float32),       # sum(z*z) per step
        ),
        grid_spec=pltpu.PrefetchScalarGridSpec(
            num_scalar_prefetch=0,
            grid=(G,),
            in_specs=[
                pl.BlockSpec((Bb, N, V), lambda g: (g, 0, 0)),  # x (batch-blocked)
                pl.BlockSpec((N, N), lambda g: (0, 0)),         # amped2 (resident)
                pl.BlockSpec((V, H), lambda g: (0, 0)),         # W1
                pl.BlockSpec((1, H), lambda g: (0, 0)),         # b1
                pl.BlockSpec((H, L), lambda g: (0, 0)),         # W2
                pl.BlockSpec((1, L), lambda g: (0, 0)),         # b2
                pl.BlockSpec((1, L), lambda g: (0, 0)),         # SEM bias
            ],
            out_specs=(
                pl.BlockSpec((None, L, Bb * N), lambda g: (g, 0, 0)),
                pl.BlockSpec((None, 1, 1), lambda g: (g, 0, 0)),
            ),
        ),
        compiler_params=pltpu.CompilerParams(dimension_semantics=("parallel",)),
        cost_estimate=cost,
    )(x, amped2, params["w1"], params["b1"], params["w2"], params["b2"],
      params["bias"])

    # Undo the lane-dense transposed layout: (G, L, Bb*N) -> (B, N, L).
    z_mu = zt.reshape(G, L, Bb, N).transpose(0, 2, 3, 1).reshape(B, N, L)

    # kl_gaussian_sem(z_mu) = 0.5 * sum(mu*mu) / batch (partials from the kernel).
    kl = 0.5 * jnp.sum(kl_part) / B
    return z_mu, kl


def encoder_reference(x, params):
    """Pure-JAX reference for correctness checking."""
    h = jnp.maximum(jnp.einsum("bnv,vh->bnh", x, params["w1"]) + params["b1"], 0.0)
    y = jnp.einsum("bnh,hl->bnl", h, params["w2"]) + params["b2"]
    n = params["adj_A"].shape[0]
    amped2 = jnp.eye(n, dtype=jnp.float32) - jnp.sinh(3.0 * params["adj_A"]).T
    yb = y + params["bias"]
    z = jnp.einsum("ij,bjl->bil", amped2, yb) - params["bias"]
    return z


if __name__ == "__main__":
    # Small shapes consistent with the module: x is (batch, num_vars, var_dim).
    B, N, V = 2, 8, 16          # batch, num_vars, var_dim
    H, L = 32, 2                # hidden_dim, latent_dim

    key = jax.random.PRNGKey(0)
    k_x, k_w1, k_b1, k_w2, k_b2, k_adj = jax.random.split(key, 6)

    x = jax.random.normal(k_x, (B, N, V), dtype=jnp.float32)

    params = {
        # nn.Linear(var_dim, hidden_dim): weight (H, V) in torch; stored transposed (V, H).
        "w1": 0.1 * jax.random.normal(k_w1, (V, H), dtype=jnp.float32),
        "b1": 0.1 * jax.random.normal(k_b1, (1, H), dtype=jnp.float32),
        # nn.Linear(hidden_dim, latent_dim): stored transposed (H, L).
        "w2": 0.1 * jax.random.normal(k_w2, (H, L), dtype=jnp.float32),
        "b2": 0.1 * jax.random.normal(k_b2, (1, L), dtype=jnp.float32),
        # adj_A is zero-initialized in __init__; small values so sinh is exercised.
        "adj_A": 0.1 * jax.random.normal(k_adj, (N, N), dtype=jnp.float32),
        # self.bias is zero-initialized in __init__.
        "bias": jnp.zeros((1, L), dtype=jnp.float32),
    }

    z_mu, kl = jax.jit(encoder_forward)(x, params)
    z_mu = jax.block_until_ready(z_mu)
    kl = jax.block_until_ready(kl)

    z_ref = encoder_reference(x, params)
    kl_ref = 0.5 * jnp.sum(z_ref * z_ref) / B
    assert z_mu.shape == (B, N, L)
    assert jnp.allclose(z_mu, z_ref, rtol=1e-4, atol=1e-5), "z_mu mismatch vs reference"
    assert jnp.allclose(kl, kl_ref, rtol=1e-4, atol=1e-5), "kl mismatch vs reference"

    print("KERNEL_OK")
</pallas_src>

<mosaic_0001>
module attributes {stable_mosaic.version = 11 : i64} {
  func.func @encoder_kernel(%arg0: i32, %arg1: memref<1x8x16xf32, #tpu.memory_space<vmem>>, %arg2: memref<8x8xf32, #tpu.memory_space<vmem>>, %arg3: memref<16x32xf32, #tpu.memory_space<vmem>>, %arg4: memref<1x32xf32, #tpu.memory_space<vmem>>, %arg5: memref<32x2xf32, #tpu.memory_space<vmem>>, %arg6: memref<1x2xf32, #tpu.memory_space<vmem>>, %arg7: memref<1x2xf32, #tpu.memory_space<vmem>>, %arg8: memref<1x2x8xf32, #tpu.memory_space<vmem>>, %arg9: memref<1x1x1xf32, #tpu.memory_space<vmem>>) attributes {dimension_semantics = [#tpu.dimension_semantics<parallel>], iteration_bounds = array<i64: 2>, scalar_prefetch = 0 : i64, scratch_operands = 0 : i64, tpu.core_type = #tpu.core_type<tc>, window_params = [{transform_indices = @transform_0, window_bounds = array<i64: 1, 8, 16>}, {pipeline_mode = #tpu.pipeline_mode<synchronous>, transform_indices = @transform_1, window_bounds = array<i64: 8, 8>}, {pipeline_mode = #tpu.pipeline_mode<synchronous>, transform_indices = @transform_2, window_bounds = array<i64: 16, 32>}, {pipeline_mode = #tpu.pipeline_mode<synchronous>, transform_indices = @transform_3, window_bounds = array<i64: 1, 32>}, {pipeline_mode = #tpu.pipeline_mode<synchronous>, transform_indices = @transform_4, window_bounds = array<i64: 32, 2>}, {pipeline_mode = #tpu.pipeline_mode<synchronous>, transform_indices = @transform_5, window_bounds = array<i64: 1, 2>}, {pipeline_mode = #tpu.pipeline_mode<synchronous>, transform_indices = @transform_6, window_bounds = array<i64: 1, 2>}, {transform_indices = @transform_7, window_bounds = array<i64: 1, 2, 8>}, {transform_indices = @transform_8, window_bounds = array<i64: 1, 1, 1>}]} {
    %c0 = arith.constant 0 : index
    %c0_0 = arith.constant 0 : index
    %c0_1 = arith.constant 0 : index
    %0 = vector.load %arg1[%c0, %c0_0, %c0_1] : memref<1x8x16xf32, #tpu.memory_space<vmem>>, vector<1x8x16xf32>
    %1 = vector.shape_cast %0 : vector<1x8x16xf32> to vector<8x16xf32>
    %c0_2 = arith.constant 0 : index
    %c0_3 = arith.constant 0 : index
    %2 = vector.load %arg3[%c0_2, %c0_3] : memref<16x32xf32, #tpu.memory_space<vmem>>, vector<16x32xf32>
    %cst = arith.constant dense<0.000000e+00> : vector<8x32xf32>
    %3 = tpu.matmul %1, %2, %cst {dimension_numbers = #tpu.dot_dimension_numbers<[1], [0], [0], [1], [0, 0, 1, 1], [], []>} : vector<8x16xf32>, vector<16x32xf32>, vector<8x32xf32> -> vector<8x32xf32>
    %c0_4 = arith.constant 0 : index
    %c0_5 = arith.constant 0 : index
    %4 = vector.load %arg4[%c0_4, %c0_5] : memref<1x32xf32, #tpu.memory_space<vmem>>, vector<1x32xf32>
    %5 = vector.broadcast %4 : vector<1x32xf32> to vector<8x32xf32>
    %6 = arith.addf %3, %5 : vector<8x32xf32>
    %cst_6 = arith.constant 0.000000e+00 : f32
    %7 = vector.broadcast %cst_6 : f32 to vector<8x32xf32>
    %8 = arith.maximumf %6, %7 : vector<8x32xf32>
    %c0_7 = arith.constant 0 : index
    %c0_8 = arith.constant 0 : index
    %9 = vector.load %arg5[%c0_7, %c0_8] : memref<32x2xf32, #tpu.memory_space<vmem>>, vector<32x2xf32>
    %cst_9 = arith.constant dense<0.000000e+00> : vector<8x2xf32>
    %10 = tpu.matmul %8, %9, %cst_9 {dimension_numbers = #tpu.dot_dimension_numbers<[1], [0], [0], [1], [0, 0, 1, 1], [], []>} : vector<8x32xf32>, vector<32x2xf32>, vector<8x2xf32> -> vector<8x2xf32>
    %c0_10 = arith.constant 0 : index
    %c0_11 = arith.constant 0 : index
    %11 = vector.load %arg6[%c0_10, %c0_11] : memref<1x2xf32, #tpu.memory_space<vmem>>, vector<1x2xf32>
    %12 = vector.broadcast %11 : vector<1x2xf32> to vector<8x2xf32>
    %13 = arith.addf %10, %12 : vector<8x2xf32>
    %c0_12 = arith.constant 0 : index
    %c0_13 = arith.constant 0 : index
    %14 = vector.load %arg7[%c0_12, %c0_13] : memref<1x2xf32, #tpu.memory_space<vmem>>, vector<1x2xf32>
    %15 = vector.broadcast %14 : vector<1x2xf32> to vector<8x2xf32>
    %16 = arith.addf %13, %15 : vector<8x2xf32>
    %17 = vector.shape_cast %16 : vector<8x2xf32> to vector<1x8x2xf32>
    %c0_14 = arith.constant 0 : index
    %c0_15 = arith.constant 0 : index
    %18 = vector.load %arg2[%c0_14, %c0_15] : memref<8x8xf32, #tpu.memory_space<vmem>>, vector<8x8xf32>
    %19 = vector.shape_cast %18 : vector<8x8xf32> to vector<1x8x8xf32>
    %cst_16 = arith.constant dense<0.000000e+00> : vector<1x8x2xf32>
    %20 = tpu.matmul %19, %17, %cst_16 {dimension_numbers = #tpu.dot_dimension_numbers<[2], [1], [1], [2], [0, 0, 0, 1, 1, 2], [0], [0]>} : vector<1x8x8xf32>, vector<1x8x2xf32>, vector<1x8x2xf32> -> vector<1x8x2xf32>
    %21 = vector.shape_cast %20 : vector<1x8x2xf32> to vector<8x2xf32>
    %22 = tpu.transpose %21, [1, 0] : vector<8x2xf32> -> vector<2x8xf32>
    %c0_17 = arith.constant 0 : index
    %c0_18 = arith.constant 0 : index
    %23 = vector.load %arg7[%c0_17, %c0_18] : memref<1x2xf32, #tpu.memory_space<vmem>>, vector<1x2xf32>
    %24 = tpu.transpose %23, [1, 0] : vector<1x2xf32> -> vector<2x1xf32>
    %25 = vector.broadcast %24 : vector<2x1xf32> to vector<2x8xf32>
    %26 = arith.subf %22, %25 : vector<2x8xf32>
    %c0_19 = arith.constant 0 : index
    %c0_20 = arith.constant 0 : index
    %c0_21 = arith.constant 0 : index
    %27 = vector.load %arg8[%c0_19, %c0_20, %c0_21] : memref<1x2x8xf32, #tpu.memory_space<vmem>>, vector<1x2x8xf32>
    %28 = vector.shape_cast %27 : vector<1x2x8xf32> to vector<2x8xf32>
    %29 = vector.shape_cast %26 : vector<2x8xf32> to vector<1x2x8xf32>
    tpu.vector_store %arg8[%c0_19, %c0_20, %c0_21], %29 {strides = array<i32>} : memref<1x2x8xf32, #tpu.memory_space<vmem>>, vector<1x2x8xf32>,
    %30 = arith.mulf %26, %26 : vector<2x8xf32>
    %31 = vector.shape_cast %30 : vector<2x8xf32> to vector<1x2x8xf32>
    %cst_22 = arith.constant dense<0.000000e+00> : vector<1xf32>
    %32 = vector.multi_reduction <add>, %31, %cst_22 [1, 2] : vector<1x2x8xf32> to vector<1xf32>
    %33 = vector.shape_cast %32 : vector<1xf32> to vector<1x1x1xf32>
    %34 = vector.extract %33[0, 0, 0] : f32 from vector<1x1x1xf32>
    %35 = vector.broadcast %34 : f32 to vector<1x1xf32>
    %c0_23 = arith.constant 0 : index
    %c0_24 = arith.constant 0 : index
    %c0_25 = arith.constant 0 : index
    %36 = vector.load %arg9[%c0_23, %c0_24, %c0_25] : memref<1x1x1xf32, #tpu.memory_space<vmem>>, vector<1x1x1xf32>
    %37 = vector.shape_cast %36 : vector<1x1x1xf32> to vector<1x1xf32>
    %38 = vector.shape_cast %35 : vector<1x1xf32> to vector<1x1x1xf32>
    tpu.vector_store %arg9[%c0_23, %c0_24, %c0_25], %38 {strides = array<i32>} : memref<1x1x1xf32, #tpu.memory_space<vmem>>, vector<1x1x1xf32>,
    return
  }
  func.func @transform_0(%arg0: i32) -> (i32, i32, i32) {
    %c0_i32 = arith.constant 0 : i32
    %c0_i32_0 = arith.constant 0 : i32
    %c0_i32_1 = arith.constant 0 : i32
    return %arg0, %c0_i32, %c0_i32_0 : i32, i32, i32
  }
  func.func @transform_1(%arg0: i32) -> (i32, i32) {
    %c0_i32 = arith.constant 0 : i32
    %c0_i32_0 = arith.constant 0 : i32
    %c0_i32_1 = arith.constant 0 : i32
    return %c0_i32, %c0_i32_0 : i32, i32
  }
  func.func @transform_2(%arg0: i32) -> (i32, i32) {
    %c0_i32 = arith.constant 0 : i32
    %c0_i32_0 = arith.constant 0 : i32
    %c0_i32_1 = arith.constant 0 : i32
    return %c0_i32, %c0_i32_0 : i32, i32
  }
  func.func @transform_3(%arg0: i32) -> (i32, i32) {
    %c0_i32 = arith.constant 0 : i32
    %c0_i32_0 = arith.constant 0 : i32
    %c0_i32_1 = arith.constant 0 : i32
    return %c0_i32, %c0_i32_0 : i32, i32
  }
  func.func @transform_4(%arg0: i32) -> (i32, i32) {
    %c0_i32 = arith.constant 0 : i32
    %c0_i32_0 = arith.constant 0 : i32
    %c0_i32_1 = arith.constant 0 : i32
    return %c0_i32, %c0_i32_0 : i32, i32
  }
  func.func @transform_5(%arg0: i32) -> (i32, i32) {
    %c0_i32 = arith.constant 0 : i32
    %c0_i32_0 = arith.constant 0 : i32
    %c0_i32_1 = arith.constant 0 : i32
    return %c0_i32, %c0_i32_0 : i32, i32
  }
  func.func @transform_6(%arg0: i32) -> (i32, i32) {
    %c0_i32 = arith.constant 0 : i32
    %c0_i32_0 = arith.constant 0 : i32
    %c0_i32_1 = arith.constant 0 : i32
    return %c0_i32, %c0_i32_0 : i32, i32
  }
  func.func @transform_7(%arg0: i32) -> (i32, i32, i32) {
    %c0_i32 = arith.constant 0 : i32
    %c0_i32_0 = arith.constant 0 : i32
    %c0_i32_1 = arith.constant 0 : i32
    return %arg0, %c0_i32, %c0_i32_0 : i32, i32, i32
  }
  func.func @transform_8(%arg0: i32) -> (i32, i32, i32) {
    %c0_i32 = arith.constant 0 : i32
    %c0_i32_0 = arith.constant 0 : i32
    %c0_i32_1 = arith.constant 0 : i32
    return %arg0, %c0_i32, %c0_i32_0 : i32, i32, i32
  }
}

</mosaic_0001>

<llo_original>
// kernel: encoder_forward.1
$region0: #{encoder_forward.1}
  #allocation0 [shape = 'u32[]', space=smem, size = 0x4, offset = 0x4, fixed_abs, tag = 'smem constant byte address 0x4 - core index']
  #allocation1 [shape = 'u32[144,128]{1,0:T(1,128)}', space=vmem, size = 0x12000, scoped, tag = 'internal scratch']
  %s0 = inlined_call_operand.vmem [shape: f32[2,8,16], index: 0, kind: input, shape index: {}]
  %s1 = inlined_call_operand.vmem [shape: f32[8,8], index: 1, kind: input, shape index: {}]
  %s2 = inlined_call_operand.vmem [shape: f32[16,32], index: 2, kind: input, shape index: {}]
  %s3 = inlined_call_operand.vmem [shape: f32[1,32], index: 3, kind: input, shape index: {}]
  %s4 = inlined_call_operand.vmem [shape: f32[32,2], index: 4, kind: input, shape index: {}]
  %s5 = inlined_call_operand.vmem [shape: f32[1,2], index: 5, kind: input, shape index: {}]
  %s6 = inlined_call_operand.vmem [shape: f32[1,2], index: 6, kind: input, shape index: {}]
  %s7 = inlined_call_operand.hbm [shape: f32[2,2,8], index: 7, kind: output, shape index: {0}]
  %s8 = inlined_call_operand.vmem [shape: f32[2,1,1], index: 8, kind: output, shape index: {1}]
  %9 = xla_tuple %s7, %s8
  %s10 = sld [smem:[#allocation0]]
  $region69: #{encoder_forward.1} parent=0
    _
  %s12 = ssub.s32 1, %s10
  %s13 = scalar_select 0, %s12, %s10
  $region1: #{encoder_forward.1} parent=0
    #allocation2 [shape = 'u8[2048]{0}', space=vmem, size = 0x800, scoped, tag = 'output window, operand 0']
    #allocation3 [shape = 's32[2]{0}', space=sflag, size = 0x8, scoped, tag = 'scoped memory for encoder_forward.1']
    %14 = vsyncpa [#allocation3], 0
    %s15 = scalar_lea.sflag [#allocation3], 1
    %16 = vsyncpa %s15, 0
    loop: start=0, step=1, limit=4
    $region2: #{encoder_forward.1} parent=1 // loop_pre_header
      _
    $region3: #{encoder_forward.1} parent=1 // loop_header
      %s18 = sphi 0, %s22
      %p19 = scmp.ge.s32.totalorder %s18, 4
      %s28 = sphi 0, %s30
      %s31 = sphi 0, %s28
      %s32 = sphi 0, %s31
      %s48 = sphi 0, %s32
      %s52 = sphi 0, %s52
      %s54 = sphi 0, %s52
      %s55 = sphi 0, %s54
      %s69 = sphi 0, %s55
      %s73 = sphi 0, %s73
      %s75 = sphi 0, %s73
      %s76 = sphi 0, %s75
      %s90 = sphi 0, %s76
      %s94 = sphi 0, %s94
      %s96 = sphi 0, %s94
      %s97 = sphi 0, %s96
      %s111 = sphi 0, %s97
      %s115 = sphi 0, %s115
      %s117 = sphi 0, %s115
      %s118 = sphi 0, %s117
      %s132 = sphi 0, %s118
      %s136 = sphi 0, %s136
      %s138 = sphi 0, %s136
      %s139 = sphi 0, %s138
      %s153 = sphi 0, %s139
      %s157 = sphi 0, %s157
      %s159 = sphi 0, %s157
      %s160 = sphi 0, %s159
      %s174 = sphi 0, %s160
      %s180 = sphi 0, %s182
      %s183 = sphi 0, %s180
      %s184 = sphi 0, %s183
      %s200 = sphi 0, %s184
      %s206 = sphi 0, %s208
      %s209 = sphi 0, %s206
      %s210 = sphi 0, %s209
      %s226 = sphi 0, %s210
    $region4: #{encoder_forward.1} parent=1 // loop_header_branch
      %21 = sbr.rel (%p19) target = $region8
    $region5: #{encoder_forward.1} parent=1 // loop_body
      %s23 = ssub.s32 %s18, 1
      %s24 = ssub.s32 %s18, 2
      %s25 = sadd.s32 %s18, 1
      %s26 = ssub.s32 %s18, %s25
      %p27 = scmp.eq.s32.totalorder %s26, 0
      %s29 = sadd.s32 %s28, 1
      %s30 = scalar_select %p27, %s28, %s29
      %p33 = pneg %p27
      %p34 = scmp.eq.s32.totalorder %s18, 1
      %p35 = por %p33, %p34
      %p36 = scmp.ne.s32.totalorder %s28, %s31
      %p37 = scmp.eq.s32.totalorder %s18, 0
      %p38 = por %p36, %p37
      %p39 = scmp.ne.s32.totalorder %s28, %s31
      %p40 = scmp.eq.s32.totalorder %s23, 1
      %p41 = por %p39, %p40
      %p42 = scmp.ne.s32.totalorder %s31, %s32
      %p43 = scmp.eq.s32.totalorder %s23, 0
      %p44 = por %p42, %p43
      %p45 = scmp.ne.s32.totalorder %s31, %s32
      %p46 = scmp.eq.s32.totalorder %s24, 1
      %p47 = por %p45, %p46
      %p49 = scmp.ne.s32.totalorder %s32, %s48
      %p50 = scmp.eq.s32.totalorder %s24, 0
      %p51 = por %p49, %p50
      %s53 = sadd.s32 %s52, 1
      %p56 = scmp.eq.s32.totalorder %s18, 1
      %p57 = scmp.ne.s32.totalorder %s52, %s54
      %p58 = scmp.eq.s32.totalorder %s18, 0
      %p59 = por %p57, %p58
      %p60 = scmp.ne.s32.totalorder %s52, %s54
      %p61 = scmp.eq.s32.totalorder %s23, 1
      %p62 = por %p60, %p61
      %p63 = scmp.ne.s32.totalorder %s54, %s55
      %p64 = scmp.eq.s32.totalorder %s23, 0
      %p65 = por %p63, %p64
      %p66 = scmp.ne.s32.totalorder %s54, %s55
      %p67 = scmp.eq.s32.totalorder %s24, 1
      %p68 = por %p66, %p67
      %p70 = scmp.ne.s32.totalorder %s55, %s69
      %p71 = scmp.eq.s32.totalorder %s24, 0
      %p72 = por %p70, %p71
      %s74 = sadd.s32 %s73, 1
      %p77 = scmp.eq.s32.totalorder %s18, 1
      %p78 = scmp.ne.s32.totalorder %s73, %s75
      %p79 = scmp.eq.s32.totalorder %s18, 0
      %p80 = por %p78, %p79
      %p81 = scmp.ne.s32.totalorder %s73, %s75
      %p82 = scmp.eq.s32.totalorder %s23, 1
      %p83 = por %p81, %p82
      %p84 = scmp.ne.s32.totalorder %s75, %s76
      %p85 = scmp.eq.s32.totalorder %s23, 0
      %p86 = por %p84, %p85
      %p87 = scmp.ne.s32.totalorder %s75, %s76
      %p88 = scmp.eq.s32.totalorder %s24, 1
      %p89 = por %p87, %p88
      %p91 = scmp.ne.s32.totalorder %s76, %s90
      %p92 = scmp.eq.s32.totalorder %s24, 0
      %p93 = por %p91, %p92
      %s95 = sadd.s32 %s94, 1
      %p98 = scmp.eq.s32.totalorder %s18, 1
      %p99 = scmp.ne.s32.totalorder %s94, %s96
      %p100 = scmp.eq.s32.totalorder %s18, 0
      %p101 = por %p99, %p100
      %p102 = scmp.ne.s32.totalorder %s94, %s96
      %p103 = scmp.eq.s32.totalorder %s23, 1
      %p104 = por %p102, %p103
      %p105 = scmp.ne.s32.totalorder %s96, %s97
      %p106 = scmp.eq.s32.totalorder %s23, 0
      %p107 = por %p105, %p106
      %p108 = scmp.ne.s32.totalorder %s96, %s97
      %p109 = scmp.eq.s32.totalorder %s24, 1
      %p110 = por %p108, %p109
      %p112 = scmp.ne.s32.totalorder %s97, %s111
      %p113 = scmp.eq.s32.totalorder %s24, 0
      %p114 = por %p112, %p113
      %s116 = sadd.s32 %s115, 1
      %p119 = scmp.eq.s32.totalorder %s18, 1
      %p120 = scmp.ne.s32.totalorder %s115, %s117
      %p121 = scmp.eq.s32.totalorder %s18, 0
      %p122 = por %p120, %p121
      %p123 = scmp.ne.s32.totalorder %s115, %s117
      %p124 = scmp.eq.s32.totalorder %s23, 1
      %p125 = por %p123, %p124
      %p126 = scmp.ne.s32.totalorder %s117, %s118
      %p127 = scmp.eq.s32.totalorder %s23, 0
      %p128 = por %p126, %p127
      %p129 = scmp.ne.s32.totalorder %s117, %s118
      %p130 = scmp.eq.s32.totalorder %s24, 1
      %p131 = por %p129, %p130
      %p133 = scmp.ne.s32.totalorder %s118, %s132
      %p134 = scmp.eq.s32.totalorder %s24, 0
      %p135 = por %p133, %p134
      %s137 = sadd.s32 %s136, 1
      %p140 = scmp.eq.s32.totalorder %s18, 1
      %p141 = scmp.ne.s32.totalorder %s136, %s138
      %p142 = scmp.eq.s32.totalorder %s18, 0
      %p143 = por %p141, %p142
      %p144 = scmp.ne.s32.totalorder %s136, %s138
      %p145 = scmp.eq.s32.totalorder %s23, 1
      %p146 = por %p144, %p145
      %p147 = scmp.ne.s32.totalorder %s138, %s139
      %p148 = scmp.eq.s32.totalorder %s23, 0
      %p149 = por %p147, %p148
      %p150 = scmp.ne.s32.totalorder %s138, %s139
      %p151 = scmp.eq.s32.totalorder %s24, 1
      %p152 = por %p150, %p151
      %p154 = scmp.ne.s32.totalorder %s139, %s153
      %p155 = scmp.eq.s32.totalorder %s24, 0
      %p156 = por %p154, %p155
      %s158 = sadd.s32 %s157, 1
      %p161 = scmp.eq.s32.totalorder %s18, 1
      %p162 = scmp.ne.s32.totalorder %s157, %s159
      %p163 = scmp.eq.s32.totalorder %s18, 0
      %p164 = por %p162, %p163
      %p165 = scmp.ne.s32.totalorder %s157, %s159
      %p166 = scmp.eq.s32.totalorder %s23, 1
      %p167 = por %p165, %p166
      %p168 = scmp.ne.s32.totalorder %s159, %s160
      %p169 = scmp.eq.s32.totalorder %s23, 0
      %p170 = por %p168, %p169
      %p171 = scmp.ne.s32.totalorder %s159, %s160
      %p172 = scmp.eq.s32.totalorder %s24, 1
      %p173 = por %p171, %p172
      %p175 = scmp.ne.s32.totalorder %s160, %s174
      %p176 = scmp.eq.s32.totalorder %s24, 0
      %p177 = por %p175, %p176
      %s178 = ssub.s32 %s18, %s25
      %p179 = scmp.eq.s32.totalorder %s178, 0
      %s181 = sadd.s32 %s180, 1
      %s182 = scalar_select %p179, %s180, %s181
      %p185 = pneg %p179
      %p186 = scmp.eq.s32.totalorder %s18, 1
      %p187 = por %p185, %p186
      %p188 = scmp.ne.s32.totalorder %s180, %s183
      %p189 = scmp.eq.s32.totalorder %s18, 0
      %p190 = por %p188, %p189
      %p191 = scmp.ne.s32.totalorder %s180, %s183
      %p192 = scmp.eq.s32.totalorder %s23, 1
      %p193 = por %p191, %p192
      %p194 = scmp.ne.s32.totalorder %s183, %s184
      %p195 = scmp.eq.s32.totalorder %s23, 0
      %p196 = por %p194, %p195
      %p197 = scmp.ne.s32.totalorder %s183, %s184
      %p198 = scmp.eq.s32.totalorder %s24, 1
      %p199 = por %p197, %p198
      %p201 = scmp.ne.s32.totalorder %s184, %s200
      %p202 = scmp.eq.s32.totalorder %s24, 0
      %p203 = por %p201, %p202
      %s204 = ssub.s32 %s18, %s25
      %p205 = scmp.eq.s32.totalorder %s204, 0
      %s207 = sadd.s32 %s206, 1
      %s208 = scalar_select %p205, %s206, %s207
      %p211 = pneg %p205
      %p212 = scmp.eq.s32.totalorder %s18, 1
      %p213 = por %p211, %p212
      %p214 = scmp.ne.s32.totalorder %s206, %s209
      %p215 = scmp.eq.s32.totalorder %s18, 0
      %p216 = por %p214, %p215
      %p217 = scmp.ne.s32.totalorder %s206, %s209
      %p218 = scmp.eq.s32.totalorder %s23, 1
      %p219 = por %p217, %p218
      %p220 = scmp.ne.s32.totalorder %s209, %s210
      %p221 = scmp.eq.s32.totalorder %s23, 0
      %p222 = por %p220, %p221
      %p223 = scmp.ne.s32.totalorder %s209, %s210
      %p224 = scmp.eq.s32.totalorder %s24, 1
      %p225 = por %p223, %p224
      %p227 = scmp.ne.s32.totalorder %s210, %s226
      %p228 = scmp.eq.s32.totalorder %s24, 0
      %p229 = por %p227, %p228
      %p230 = scmp.le.s32.totalorder 1, %s18
      %p231 = scmp.lt.s32.totalorder %s18, 3
      %p232 = pnand %p230, %p231
      %p233 = pneg %p232
      // Predicated region
      $region9: #{encoder_forward.1} parent=5 // pred_check
        _
      $region10: #{encoder_forward.1} parent=5 // pred_check_branch
        %235 = sbr.rel (%p232) target = $region12
      $region11: #{encoder_forward.1} parent=5 // pred_region
        %s236 = ssub.s32 %s18, 1
        // Predicated region
        $region13: #{encoder_forward.1} parent=11 // pred_check
          %p237 = pneg %p65
        $region14: #{encoder_forward.1} parent=11 // pred_check_branch
          %239 = sbr.rel (%p237) target = $region16
        $region15: #{encoder_forward.1} parent=11 // pred_region
          _
        $region16: #{encoder_forward.1} parent=11 // pred_fallthru
          _
        // Predicated region
        $region17: #{encoder_forward.1} parent=11 // pred_check
          %p240 = pneg %p86
        $region18: #{encoder_forward.1} parent=11 // pred_check_branch
          %242 = sbr.rel (%p240) target = $region20
        $region19: #{encoder_forward.1} parent=11 // pred_region
          _
        $region20: #{encoder_forward.1} parent=11 // pred_fallthru
          _
        // Predicated region
        $region21: #{encoder_forward.1} parent=11 // pred_check
          %p243 = pneg %p107
        $region22: #{encoder_forward.1} parent=11 // pred_check_branch
          %245 = sbr.rel (%p243) target = $region24
        $region23: #{encoder_forward.1} parent=11 // pred_region
          _
        $region24: #{encoder_forward.1} parent=11 // pred_fallthru
          _
        // Predicated region
        $region25: #{encoder_forward.1} parent=11 // pred_check
          %p246 = pneg %p128
        $region26: #{encoder_forward.1} parent=11 // pred_check_branch
          %248 = sbr.rel (%p246) target = $region28
        $region27: #{encoder_forward.1} parent=11 // pred_region
          _
        $region28: #{encoder_forward.1} parent=11 // pred_fallthru
          _
        // Predicated region
        $region29: #{encoder_forward.1} parent=11 // pred_check
          %p249 = pneg %p149
        $region30: #{encoder_forward.1} parent=11 // pred_check_branch
          %251 = sbr.rel (%p249) target = $region32
        $region31: #{encoder_forward.1} parent=11 // pred_region
          _
        $region32: #{encoder_forward.1} parent=11 // pred_fallthru
          _
        // Predicated region
        $region33: #{encoder_forward.1} parent=11 // pred_check
          %p252 = pneg %p170
        $region34: #{encoder_forward.1} parent=11 // pred_check_branch
          %254 = sbr.rel (%p252) target = $region36
        $region35: #{encoder_forward.1} parent=11 // pred_region
          _
        $region36: #{encoder_forward.1} parent=11 // pred_fallthru
          _
      $region12: #{encoder_forward.1} parent=5 // pred_fallthru
        _
      %p255 = scmp.lt.s32.totalorder %s18, 2
      // Predicated region
      $region37: #{encoder_forward.1} parent=5 // pred_check
        %p256 = pneg %p255
      $region38: #{encoder_forward.1} parent=5 // pred_check_branch
        %258 = sbr.rel (%p256) target = $region40
      $region39: #{encoder_forward.1} parent=5 // pred_region
        // Predicated region
        $region41: #{encoder_forward.1} parent=39 // pred_check
          %p259 = pneg %p38
        $region42: #{encoder_forward.1} parent=39 // pred_check_branch
          %261 = sbr.rel (%p259) target = $region44
        $region43: #{encoder_forward.1} parent=39 // pred_region
          %p262 = scmp.lt.s32.totalorder %s18, 1
          %s263 = scalar_select %p262, %s18, 1
          %s264 = smul.addr %s263, 8
          %s265 = scalar_lea.vmem %s0, %s264
        $region44: #{encoder_forward.1} parent=39 // pred_fallthru
          _
      $region40: #{encoder_forward.1} parent=5 // pred_fallthru
        _
      %p266 = scmp.le.s32.totalorder 1, %s18
      %p267 = scmp.lt.s32.totalorder %s18, 3
      %p268 = pnand %p266, %p267
      %p269 = pneg %p268
      // Predicated region
      $region45: #{encoder_forward.1} parent=5 // pred_check
        _
      $region46: #{encoder_forward.1} parent=5 // pred_check_branch
        %271 = sbr.rel (%p268) target = $region48
      $region47: #{encoder_forward.1} parent=5 // pred_region
        %s272 = ssub.s32 %s18, 1
        %p273 = scmp.lt.s32.totalorder %s23, 1
        %s274 = scalar_select %p273, %s23, 1
        %s275 = smul.addr %s274, 8
        %s276 = scalar_lea.vmem %s0, %s275
        %p277 = pneg %p44
        %p278 = pneg %p41
        %p279 = pneg %p65
        %p280 = pneg %p62
        %p281 = pneg %p86
        %p282 = pneg %p83
        %p283 = pneg %p107
        %p284 = pneg %p104
        %p285 = pneg %p128
        %p286 = pneg %p125
        %p287 = pneg %p149
        %p288 = pneg %p146
        %p289 = pneg %p170
        %p290 = pneg %p167
        %p291 = pneg %p196
        %p292 = pneg %p193
        %s293 = sand.u32 %s183, 1
        %s294 = scalar_lea.sflag [#allocation3], %s293
        %s295 = sand.u32 %s183, 1
        %s296 = smul.addr %s295, 2
        %s297 = scalar_lea.vmem [#allocation2], %s296
        %p298 = pneg %p222
        %p299 = pneg %p219
        %p300 = scmp.lt.s32.totalorder %s23, 1
        %s301 = scalar_select %p300, %s23, 1
        %s302 = scalar_lea.vmem %s8, %s301
        %p303 = scmp.lt.s32.totalorder %s23, 1
        %s304 = scalar_select %p303, %s23, 1
        %s305 = smul.addr %s304, 8
        %s306 = scalar_lea.vmem %s0, %s305
        %p307 = scmp.lt.s32.totalorder %s23, 1
        %s308 = scalar_select %p307, %s23, 1
        %s309 = scalar_lea.vmem %s8, %s308
        %v310 = vld [vmem:[%s306] sm:$0xff]
        %v311 = vld [vmem:[%s2] sm:$0xff]
        %v312 = vld [vmem:[%s2 + $0x8] sm:$0xff]
        %v313 = vld [vmem:[%s3] sm:$0x1]
        %v315 = vlaneseq
        %v316 = vshrl.u32 %v315, 7
        %v317 = vsub.s32 0, %v316
        %v318 = vrot.slane %v313, %v317
        %vm320 = vcmask 130048
        %v322 = vsel %vm320, %v310, 0
        %324 = vmatprep.subr.mxu0 0.0
        %325 = vmatpush1.msra.mxu0 %v311
        %326 = vmatprep.subr.mxu0 0.0
        %327 = vmatpush1.msra.mxu0 %v312
        %328 = vmatprep.subr.mxu0 0.0
        %329 = vmatpush1.msra.mxu0 0.0
        %330 = vmatprep.subr.mxu0 0.0
        %331 = vmatpush1.msra.mxu0 0.0
        %332 = vmatprep.subr.mxu0 0.0
        %333 = vmatpush1.msra.mxu0 0.0
        %334 = vmatprep.subr.mxu0 0.0
        %335 = vmatpush1.msra.mxu0 0.0
        %336 = vmatprep.subr.mxu0 0.0
        %337 = vmatpush1.msra.mxu0 0.0
        %338 = vmatprep.subr.mxu0 0.0
        %339 = vmatpush1.msra.mxu0 0.0
        %340 = vmatprep.subr.mxu0 0.0
        %341 = vmatpush1.msra.mxu0 0.0
        %342 = vmatprep.subr.mxu0 0.0
        %343 = vmatpush1.msra.mxu0 0.0
        %344 = vmatprep.subr.mxu0 0.0
        %345 = vmatpush1.msra.mxu0 0.0
        %346 = vmatprep.subr.mxu0 0.0
        %347 = vmatpush1.msra.mxu0 0.0
        %348 = vmatprep.subr.mxu0 0.0
        %349 = vmatpush1.msra.mxu0 0.0
        %350 = vmatprep.subr.mxu0 0.0
        %351 = vmatpush1.msra.mxu0 0.0
        %352 = vmatprep.subr.mxu0 0.0
        %353 = vmatpush1.msra.mxu0 0.0
        %354 = vmatprep.subr.mxu0 0.0
        %355 = vmatpush1.msra.mxu0 0.0
        %356 = vmatprep.subr.mxu0 0.0
        %357 = vmatpush1.msra.mxu0 0.0
        %358 = vmatprep.subr.mxu0 0.0
        %359 = vmatpush1.msra.mxu0 0.0
        %360 = vmatprep.subr.mxu0 0.0
        %361 = vmatpush1.msra.mxu0 0.0
        %362 = vmatprep.subr.mxu0 0.0
        %363 = vmatpush1.msra.mxu0 0.0
        %364 = vmatprep.subr.mxu0 0.0
        %365 = vmatpush1.msra.mxu0 0.0
        %366 = vmatprep.subr.mxu0 0.0
        %367 = vmatpush1.msra.mxu0 0.0
        %368 = vmatprep.subr.mxu0 0.0
        %369 = vmatpush1.msra.mxu0 0.0
        %370 = vmatprep.subr.mxu0 0.0
        %371 = vmatpush1.msra.mxu0 0.0
        %372 = vmatprep.subr.mxu0 0.0
        %373 = vmatpush1.msra.mxu0 0.0
        %374 = vmatprep.subr.mxu0 0.0
        %375 = vmatpush1.msra.mxu0 0.0
        %376 = vmatprep.subr.mxu0 0.0
        %377 = vmatpush1.msra.mxu0 0.0
        %378 = vmatprep.subr.mxu0 0.0
        %379 = vmatpush1.msra.mxu0 0.0
        %380 = vmatprep.subr.mxu0 0.0
        %381 = vmatpush1.msra.mxu0 0.0
        %382 = vmatprep.subr.mxu0 0.0
        %383 = vmatpush1.msra.mxu0 0.0
        %384 = vmatprep.subr.mxu0 0.0
        %385 = vmatpush1.msra.mxu0 0.0
        %386 = vmatprep.subr.mxu0 0.0
        %387 = vmatpush1.msra.mxu0 0.0
        %388 = vmatprep.mubr.f32.mxu0 0.0
        %389 = vmatmul.mubr.f32.gmra.mrb[0].mxu0 %v322
        %v390 = vpop.f32.mrb[0].mxu0
        %v391 = vadd.f32 %v318, %v390
        %v392 = vpop.f32.mrb[0].mxu0
        %393 = vdwg.mxu0
        %v394 = vmax.f32 %v391, 0.0
        %v395 = vld [vmem:[%s4] sm:$0xff]
        %v396 = vld [vmem:[%s4 + $0x8] sm:$0xff]
        %v397 = vld [vmem:[%s4 + $0x10] sm:$0xff]
        %v398 = vld [vmem:[%s4 + $0x18] sm:$0xff]
        %v399 = vld [vmem:[%s5] sm:$0x1]
        %v401 = vlaneseq
        %v402 = vshrl.u32 %v401, 7
        %v403 = vsub.s32 0, %v402
        %v404 = vrot.slane %v399, %v403
        %vm406 = vcmask 261120
        %v408 = vsel %vm406, %v394, 0
        %410 = vmatprep.subr.mxu0 0.0
        %411 = vmatpush1.msra.mxu0 %v395
        %412 = vmatprep.subr.mxu0 0.0
        %413 = vmatpush1.msra.mxu0 %v396
        %414 = vmatprep.subr.mxu0 0.0
        %415 = vmatpush1.msra.mxu0 %v397
        %416 = vmatprep.subr.mxu0 0.0
        %417 = vmatpush1.msra.mxu0 %v398
        %418 = vmatprep.subr.mxu0 0.0
        %419 = vmatpush1.msra.mxu0 0.0
        %420 = vmatprep.subr.mxu0 0.0
        %421 = vmatpush1.msra.mxu0 0.0
        %422 = vmatprep.subr.mxu0 0.0
        %423 = vmatpush1.msra.mxu0 0.0
        %424 = vmatprep.subr.mxu0 0.0
        %425 = vmatpush1.msra.mxu0 0.0
        %426 = vmatprep.subr.mxu0 0.0
        %427 = vmatpush1.msra.mxu0 0.0
        %428 = vmatprep.subr.mxu0 0.0
        %429 = vmatpush1.msra.mxu0 0.0
        %430 = vmatprep.subr.mxu0 0.0
        %431 = vmatpush1.msra.mxu0 0.0
        %432 = vmatprep.subr.mxu0 0.0
        %433 = vmatpush1.msra.mxu0 0.0
        %434 = vmatprep.subr.mxu0 0.0
        %435 = vmatpush1.msra.mxu0 0.0
        %436 = vmatprep.subr.mxu0 0.0
        %437 = vmatpush1.msra.mxu0 0.0
        %438 = vmatprep.subr.mxu0 0.0
        %439 = vmatpush1.msra.mxu0 0.0
        %440 = vmatprep.subr.mxu0 0.0
        %441 = vmatpush1.msra.mxu0 0.0
        %442 = vmatprep.subr.mxu0 0.0
        %443 = vmatpush1.msra.mxu0 0.0
        %444 = vmatprep.subr.mxu0 0.0
        %445 = vmatpush1.msra.mxu0 0.0
        %446 = vmatprep.subr.mxu0 0.0
        %447 = vmatpush1.msra.mxu0 0.0
        %448 = vmatprep.subr.mxu0 0.0
        %449 = vmatpush1.msra.mxu0 0.0
        %450 = vmatprep.subr.mxu0 0.0
        %451 = vmatpush1.msra.mxu0 0.0
        %452 = vmatprep.subr.mxu0 0.0
        %453 = vmatpush1.msra.mxu0 0.0
        %454 = vmatprep.subr.mxu0 0.0
        %455 = vmatpush1.msra.mxu0 0.0
        %456 = vmatprep.subr.mxu0 0.0
        %457 = vmatpush1.msra.mxu0 0.0
        %458 = vmatprep.subr.mxu0 0.0
        %459 = vmatpush1.msra.mxu0 0.0
        %460 = vmatprep.subr.mxu0 0.0
        %461 = vmatpush1.msra.mxu0 0.0
        %462 = vmatprep.subr.mxu0 0.0
        %463 = vmatpush1.msra.mxu0 0.0
        %464 = vmatprep.subr.mxu0 0.0
        %465 = vmatpush1.msra.mxu0 0.0
        %466 = vmatprep.subr.mxu0 0.0
        %467 = vmatpush1.msra.mxu0 0.0
        %468 = vmatprep.subr.mxu0 0.0
        %469 = vmatpush1.msra.mxu0 0.0
        %470 = vmatprep.subr.mxu0 0.0
        %471 = vmatpush1.msra.mxu0 0.0
        %472 = vmatprep.subr.mxu0 0.0
        %473 = vmatpush1.msra.mxu0 0.0
        %474 = vmatprep.mubr.f32.mxu0 0.0
        %475 = vmatmul.mubr.f32.gmra.mrb[0].mxu0 %v408
        %v476 = vpop.f32.mrb[0].mxu0
        %v477 = vadd.f32 %v404, %v476
        %v478 = vpop.f32.mrb[0].mxu0
        %479 = vdwg.mxu0
        %v480 = vld [vmem:[%s6] sm:$0x1]
        %v482 = vlaneseq
        %v483 = vshrl.u32 %v482, 7
        %v484 = vsub.s32 0, %v483
        %v485 = vrot.slane %v480, %v484
        %v487 = vadd.f32 %v477, %v485
        %v488 = vld [vmem:[%s1] sm:$0xff]
        %vm489 = vcmask 64512
        %v491 = vsel %vm489, %v488, 0
        %493 = vmatprep.subr.mxu0 0.0
        %494 = vmatpush1.msra.mxu0 %v487
        %495 = vmatprep.subr.mxu0 0.0
        %496 = vmatpush1.msra.mxu0 0.0
        %497 = vmatprep.subr.mxu0 0.0
        %498 = vmatpush1.msra.mxu0 0.0
        %499 = vmatprep.subr.mxu0 0.0
        %500 = vmatpush1.msra.mxu0 0.0
        %501 = vmatprep.subr.mxu0 0.0
        %502 = vmatpush1.msra.mxu0 0.0
        %503 = vmatprep.subr.mxu0 0.0
        %504 = vmatpush1.msra.mxu0 0.0
        %505 = vmatprep.subr.mxu0 0.0
        %506 = vmatpush1.msra.mxu0 0.0
        %507 = vmatprep.subr.mxu0 0.0
        %508 = vmatpush1.msra.mxu0 0.0
        %509 = vmatprep.subr.mxu0 0.0
        %510 = vmatpush1.msra.mxu0 0.0
        %511 = vmatprep.subr.mxu0 0.0
        %512 = vmatpush1.msra.mxu0 0.0
        %513 = vmatprep.subr.mxu0 0.0
        %514 = vmatpush1.msra.mxu0 0.0
        %515 = vmatprep.subr.mxu0 0.0
        %516 = vmatpush1.msra.mxu0 0.0
        %517 = vmatprep.subr.mxu0 0.0
        %518 = vmatpush1.msra.mxu0 0.0
        %519 = vmatprep.subr.mxu0 0.0
        %520 = vmatpush1.msra.mxu0 0.0
        %521 = vmatprep.subr.mxu0 0.0
        %522 = vmatpush1.msra.mxu0 0.0
        %523 = vmatprep.subr.mxu0 0.0
        %524 = vmatpush1.msra.mxu0 0.0
        %525 = vmatprep.subr.mxu0 0.0
        %526 = vmatpush1.msra.mxu0 0.0
        %527 = vmatprep.subr.mxu0 0.0
        %528 = vmatpush1.msra.mxu0 0.0
        %529 = vmatprep.subr.mxu0 0.0
        %530 = vmatpush1.msra.mxu0 0.0
        %531 = vmatprep.subr.mxu0 0.0
        %532 = vmatpush1.msra.mxu0 0.0
        %533 = vmatprep.subr.mxu0 0.0
        %534 = vmatpush1.msra.mxu0 0.0
        %535 = vmatprep.subr.mxu0 0.0
        %536 = vmatpush1.msra.mxu0 0.0
        %537 = vmatprep.subr.mxu0 0.0
        %538 = vmatpush1.msra.mxu0 0.0
        %539 = vmatprep.subr.mxu0 0.0
        %540 = vmatpush1.msra.mxu0 0.0
        %541 = vmatprep.subr.mxu0 0.0
        %542 = vmatpush1.msra.mxu0 0.0
        %543 = vmatprep.subr.mxu0 0.0
        %544 = vmatpush1.msra.mxu0 0.0
        %545 = vmatprep.subr.mxu0 0.0
        %546 = vmatpush1.msra.mxu0 0.0
        %547 = vmatprep.subr.mxu0 0.0
        %548 = vmatpush1.msra.mxu0 0.0
        %549 = vmatprep.subr.mxu0 0.0
        %550 = vmatpush1.msra.mxu0 0.0
        %551 = vmatprep.subr.mxu0 0.0
        %552 = vmatpush1.msra.mxu0 0.0
        %553 = vmatprep.subr.mxu0 0.0
        %554 = vmatpush1.msra.mxu0 0.0
        %555 = vmatprep.subr.mxu0 0.0
        %556 = vmatpush1.msra.mxu0 0.0
        %557 = vmatprep.mubr.f32.mxu0 0.0
        %558 = vmatmul.mubr.f32.gmra.mrb[0].mxu0 %v491
        %v559 = vpop.f32.mrb[0].mxu0
        %v560 = vadd.f32 0.0, %v559
        %v561 = vpop.f32.mrb[0].mxu0
        %562 = vdwg.mxu0
        %563 = vxpose.xlu0.b32.start [1/16] %v560, 128
        %564 = vxpose.xlu0.b32.cont [2/16] 0.0, 128
        %565 = vxpose.xlu0.b32.cont [3/16] 0.0, 128
        %566 = vxpose.xlu0.b32.cont [4/16] 0.0, 128
        %567 = vxpose.xlu0.b32.cont [5/16] 0.0, 128
        %568 = vxpose.xlu0.b32.cont [6/16] 0.0, 128
        %569 = vxpose.xlu0.b32.cont [7/16] 0.0, 128
        %570 = vxpose.xlu0.b32.cont [8/16] 0.0, 128
        %571 = vxpose.xlu0.b32.cont [9/16] 0.0, 128
        %572 = vxpose.xlu0.b32.cont [10/16] 0.0, 128
        %573 = vxpose.xlu0.b32.cont [11/16] 0.0, 128
        %574 = vxpose.xlu0.b32.cont [12/16] 0.0, 128
        %575 = vxpose.xlu0.b32.cont [13/16] 0.0, 128
        %576 = vxpose.xlu0.b32.cont [14/16] 0.0, 128
        %577 = vxpose.xlu0.b32.cont [15/16] 0.0, 128
        %578 = vxpose.xlu0.b32.end [16/16] 0.0, 128
        %v579 = vpop.trf.xlu0
        %v580 = vpop.trf.xlu0
        %v581 = vpop.trf.xlu0
        %v582 = vpop.trf.xlu0
        %v583 = vpop.trf.xlu0
        %v584 = vpop.trf.xlu0
        %v585 = vpop.trf.xlu0
        %v586 = vpop.trf.xlu0
        %v587 = vpop.trf.xlu0
        %v588 = vpop.trf.xlu0
        %v589 = vpop.trf.xlu0
        %v590 = vpop.trf.xlu0
        %v591 = vpop.trf.xlu0
        %v592 = vpop.trf.xlu0
        %v593 = vpop.trf.xlu0
        %v594 = vpop.trf.xlu0
        %595 = vxpose.xlu0.b32.start [1/16] %v480, 128
        %596 = vxpose.xlu0.b32.cont [2/16] 0.0, 128
        %597 = vxpose.xlu0.b32.cont [3/16] 0.0, 128
        %598 = vxpose.xlu0.b32.cont [4/16] 0.0, 128
        %599 = vxpose.xlu0.b32.cont [5/16] 0.0, 128
        %600 = vxpose.xlu0.b32.cont [6/16] 0.0, 128
        %601 = vxpose.xlu0.b32.cont [7/16] 0.0, 128
        %602 = vxpose.xlu0.b32.cont [8/16] 0.0, 128
        %603 = vxpose.xlu0.b32.cont [9/16] 0.0, 128
        %604 = vxpose.xlu0.b32.cont [10/16] 0.0, 128
        %605 = vxpose.xlu0.b32.cont [11/16] 0.0, 128
        %606 = vxpose.xlu0.b32.cont [12/16] 0.0, 128
        %607 = vxpose.xlu0.b32.cont [13/16] 0.0, 128
        %608 = vxpose.xlu0.b32.cont [14/16] 0.0, 128
        %609 = vxpose.xlu0.b32.cont [15/16] 0.0, 128
        %610 = vxpose.xlu0.b32.end [16/16] 0.0, 128
        %v611 = vpop.trf.xlu0
        %v612 = vpop.trf.xlu0
        %v613 = vpop.trf.xlu0
        %v614 = vpop.trf.xlu0
        %v615 = vpop.trf.xlu0
        %v616 = vpop.trf.xlu0
        %v617 = vpop.trf.xlu0
        %v618 = vpop.trf.xlu0
        %v619 = vpop.trf.xlu0
        %v620 = vpop.trf.xlu0
        %v621 = vpop.trf.xlu0
        %v622 = vpop.trf.xlu0
        %v623 = vpop.trf.xlu0
        %v624 = vpop.trf.xlu0
        %v625 = vpop.trf.xlu0
        %v626 = vpop.trf.xlu0
        %628 = vset.pattern.permute.xlu0 0
        %629 = vperm.xlu0 %628, %v611
        %v630 = vpop.permute.xlu0 %629
        %v632 = vsub.f32 %v579, %v630
        %vm633 = vcmask 58368
        %634 = vst.msk [vmem:[%s297] sm:$0x3] %vm633, %v632
        %v635 = vmul.f32 %v632, %v632
        %v636 = vsel %vm633, %v635, 0.0
        %637 = vadd.xlane.f32.xlu0 %v636
        %v638 = vpop.xlane.xlu0 %637
        %v639 = vrot.slane %v638, 4
        %v640 = vadd.f32 %v638, %v639
        %v641 = vrot.slane %v640, 2
        %v642 = vadd.f32 %v640, %v641
        %v643 = vrot.slane %v642, 1
        %v644 = vadd.f32 %v642, %v643
        %s645 = vtos %v644
        %v646 = vstv %s645
        %vm647 = vcmask 0
        %648 = vst.msk [vmem:[%s309] sm:$0x1] %vm647, %v646
        %s649 = sand.u32 %s183, 1
        %s650 = scalar_lea.sflag [#allocation3], %s649
        %s651 = sand.u32 %s183, 1
        %s652 = smul.addr %s651, 2
        %s653 = scalar_lea.vmem [#allocation2], %s652
        %p654 = scmp.lt.s32.totalorder %s23, 1
        %s655 = scalar_select %p654, %s23, 1
        %s656 = scalar_lea.vmem %s8, %s655
        // Predicated region
        $region49: #{encoder_forward.1} parent=47 // pred_check
          %p657 = pneg %p193
        $region50: #{encoder_forward.1} parent=47 // pred_check_branch
          %659 = sbr.rel (%p657) target = $region52
        $region51: #{encoder_forward.1} parent=47 // pred_region
          %s661 = ssub.s32 32, 32
          %662 = vsyncadd %s650, %s661
          %s663 = smul.addr %s23, 32
          %s664 = scalar_lea.hbm %s7, %s663
          %s666 = sshll.u32 %s653, 4
          %s667 = int_to_ptr.vmem [resolvable:$true] %s666
          %669 = dma.vmem_to_hbm [thread:$0]  %s667, 32, %s664, %s650
        $region52: #{encoder_forward.1} parent=47 // pred_fallthru
          _
        // Predicated region
        $region53: #{encoder_forward.1} parent=47 // pred_check
          %p670 = pneg %p219
        $region54: #{encoder_forward.1} parent=47 // pred_check_branch
          %672 = sbr.rel (%p670) target = $region56
        $region55: #{encoder_forward.1} parent=47 // pred_region
          _
        $region56: #{encoder_forward.1} parent=47 // pred_fallthru
          _
      $region48: #{encoder_forward.1} parent=5 // pred_fallthru
        _
      %p673 = scmp.le.s32.totalorder 2, %s18
      // Predicated region
      $region57: #{encoder_forward.1} parent=5 // pred_check
        %p674 = pneg %p673
      $region58: #{encoder_forward.1} parent=5 // pred_check_branch
        %676 = sbr.rel (%p674) target = $region60
      $region59: #{encoder_forward.1} parent=5 // pred_region
        %s677 = ssub.s32 %s18, 2
        // Predicated region
        $region61: #{encoder_forward.1} parent=59 // pred_check
          %p678 = pneg %p199
        $region62: #{encoder_forward.1} parent=59 // pred_check_branch
          %680 = sbr.rel (%p678) target = $region64
        $region63: #{encoder_forward.1} parent=59 // pred_region
          %s681 = sand.u32 %s184, 1
          %s682 = scalar_lea.sflag [#allocation3], %s681
          %s683 = sand.u32 %s184, 1
          %s684 = smul.addr %s683, 2
          %s685 = scalar_lea.vmem [#allocation2], %s684
          %686 = dma.done %s682, 32
        $region64: #{encoder_forward.1} parent=59 // pred_fallthru
          _
        // Predicated region
        $region65: #{encoder_forward.1} parent=59 // pred_check
          %p687 = pneg %p225
        $region66: #{encoder_forward.1} parent=59 // pred_check_branch
          %689 = sbr.rel (%p687) target = $region68
        $region67: #{encoder_forward.1} parent=59 // pred_region
          %p690 = scmp.lt.s32.totalorder %s24, 1
          %s691 = scalar_select %p690, %s24, 1
          %s692 = scalar_lea.vmem %s8, %s691
        $region68: #{encoder_forward.1} parent=59 // pred_fallthru
          _
      $region60: #{encoder_forward.1} parent=5 // pred_fallthru
        _
    $region6: #{encoder_forward.1} parent=1 // loop_footer
      %s22 = sadd.s32 1, %s18
    $region7: #{encoder_forward.1} parent=1 // loop_footer_branch
      %17 = sbr.rel target = $region3
    $region8: #{encoder_forward.1} parent=1 // loop_exit
      _
    %693 = vsyncpa [#allocation3], 1
    %s694 = scalar_lea.sflag [#allocation3], 1
    %695 = vsyncpa %s694, 1

</llo_original>
